<compile_context>
chip_gen: v7x
topology: tpu7x:2x2x1
jax: 0.10.0
libtpu: 0.0.40
codegen_flags: <defaults>
</compile_context>

<pallas_src>
import functools

import jax
import jax.numpy as jnp
from jax.experimental import pallas as pl
from jax.experimental.pallas import tpu as pltpu


def _round_up(v, m):
    return ((v + m - 1) // m) * m


def _dfl_exp_kernel(x_ref, t_ref, out_ref, acc_ref, *,
                    gamma, temperature, hw, tl, tps, needs_mask):
    """One (C, TL) class-major tile of positions for one (shard, batch-row)."""
    j = pl.program_id(2)

    @pl.when(j == 0)
    def _():
        acc_ref[...] = jnp.zeros_like(acc_ref)

    x = x_ref[0].astype(jnp.float32)              # (C, TL) logits (in-kernel cast)
    tgt = t_ref[0]                                # (1, TL) int32 targets
    c = x.shape[0]

    # Numerically stable softmax pieces: ONE full-slab exp; everything
    # target-dependent stays on (1, TL) rows.
    mx = jnp.max(x, axis=0, keepdims=True)        # (1, TL)
    shifted = x - mx                              # (C, TL), <= 0
    e = jnp.exp(shifted)                          # (C, TL) -- the only big exp
    s = jnp.sum(e, axis=0, keepdims=True)         # (1, TL)
    inv_s = pl.reciprocal(s)                      # exact; EUP slot
    log_s = jnp.log(s)                            # (1, TL)

    # Target-class shifted logit via select + sublane max (no one-hot cast/mul).
    class_ids = jax.lax.broadcasted_iota(jnp.int32, (c, tl), 0)
    shifted_k = jnp.max(jnp.where(class_ids == tgt, shifted, -jnp.inf),
                        axis=0, keepdims=True)    # (1, TL)
    logp_k = shifted_k - log_s                    # (1, TL) = log p_target
    p_k = jnp.exp(shifted_k) * inv_s              # (1, TL) exp only on a row

    # p_j = largest class prob strictly smaller than p_k (torch.lt + topk(1)).
    # Monotonicity (inv_s > 0, exp monotone): probs < p_k <=> shifted < shifted_k,
    # so the full-slab probs = e * inv_s is never materialized.
    e_j = jnp.max(jnp.where(shifted < shifted_k, e, 0.0), axis=0, keepdims=True)
    p_j = e_j * inv_s                             # (1, TL)

    # gamma specialised at trace time: gamma == 0 skips pow entirely, small
    # integer gamma unrolls into multiplies (avoids the EUP exp/log pow path).
    if gamma == 0:
        loss0 = -logp_k
    else:
        base = 1.0 - p_k + p_j
        if float(gamma) == int(gamma) and 0 < int(gamma) <= 8:
            focal = base
            for _ in range(int(gamma) - 1):
                focal = focal * base
        else:
            focal = base ** gamma
        loss0 = -focal * logp_k

    # weight = exp(clamp(loss, 0, T) / (T + 1)) - 1
    # (torch.no_grad / .detach are autograd-only -> forward no-op here)
    w = jnp.exp(jnp.clip(loss0, 0.0, temperature) / (temperature + 1.0)) - 1.0
    loss = loss0 * w                              # (1, TL)

    if needs_mask:
        # Covers both the ragged tail of the position axis and any duplicated
        # (fully out-of-range) tile a shard may own.  Keep it a SELECT so
        # garbage lanes never propagate NaN/Inf into the accumulator.
        gj = pl.program_id(0) * tps + j           # unclamped global tile index
        col = gj * tl + jax.lax.broadcasted_iota(jnp.int32, (1, tl), 1)
        loss = jnp.where(col < hw, loss, 0.0)

    # Lane-shaped accumulator: elementwise add per tile; one reduce at the end.
    acc_ref[...] += loss

    @pl.when(j == pl.num_programs(2) - 1)
    def _():
        out_ref[...] = jnp.sum(acc_ref[...]).reshape(1, 1, 1)


def dual_focal_loss_exp(logits, target, gamma=0, size_average=False,
                        temperature=1.0, max_tl=None):
    """JAX/Pallas equivalent of DualFocalLossExp.forward.

    logits: (N, C, *spatial) or (R, C); target: integer class ids with the
    matching leading/spatial shape.  bf16 logits are accepted as-is (the cast
    to f32 happens in-kernel, halving HBM read traffic).  Returns a scalar
    (sum, or mean when size_average=True).
    """
    if logits.ndim > 2:
        n, c = logits.shape[0], logits.shape[1]
        hw = 1
        for d in logits.shape[2:]:
            hw *= d
        x3 = logits.reshape(n, c, hw)              # free view: NCHW is class-major
    else:
        # TODO(synk): add a position-major kernel variant for the flat (R, C)
        # path so this wrapper transpose (extra HBM read+write) can be dropped.
        r, c = logits.shape
        n, hw = 1, r
        x3 = logits.T.reshape(1, c, r)
    t3 = target.reshape(n, 1, hw).astype(jnp.int32)

    in_itemsize = jnp.dtype(logits.dtype).itemsize

    # ---- position-tile width from a per-generation VMEM budget -------------
    try:
        vmem_cap = int(pltpu.get_tpu_info().vmem_capacity_bytes)
    except Exception:
        vmem_cap = 64 * 1024 * 1024                # conservative (v7x per-TC)
    budget = min(vmem_cap // 2, 48 * 1024 * 1024)
    # ~per-lane-column bytes: double-buffered input tile + ~6 live f32 (C, TL)
    # intermediates + targets / accumulator / (1, TL) rows.
    bytes_per_col = c * (2 * in_itemsize + 6 * 4) + 96
    tl_cap = budget // bytes_per_col
    tl_cap = max(128, min(32768, (tl_cap // 128) * 128))
    if max_tl is not None:                         # testing / manual override
        tl_cap = max(128, min(tl_cap, (max_tl // 128) * 128))

    if hw <= tl_cap:
        tl = hw                                    # full extent (any width OK)
        t_tiles = 1
    else:
        n_t = pl.cdiv(hw, tl_cap)                  # balanced tile widths
        tl = _round_up(pl.cdiv(hw, n_t), 128)
        t_tiles = pl.cdiv(hw, tl)

    # Leading shard axis: lets v7x's two TensorCores split the position tiles
    # even when N == 1; near-free on single-TC v5e/v6e.
    n_shards = 2 if t_tiles >= 2 else 1
    tps = pl.cdiv(t_tiles, n_shards)               # tiles per shard
    needs_mask = (t_tiles * tl != hw) or (n_shards * tps != t_tiles)

    vmem_limit = int(min(vmem_cap * 9 // 10,
                         max(32 * 1024 * 1024, 2 * bytes_per_col * tl)))

    r_total = n * hw
    cost = pl.CostEstimate(
        flops=int(10 * r_total * c),
        transcendentals=int(r_total * (c + 3)),
        bytes_accessed=int(r_total * c * in_itemsize + r_total * 4
                           + n_shards * n * 4),
    )

    kernel = functools.partial(
        _dfl_exp_kernel, gamma=gamma, temperature=float(temperature),
        hw=hw, tl=tl, tps=tps, needs_mask=needs_mask)

    last_tile = t_tiles - 1

    def x_map(s, i, j):
        return (i, 0, jnp.minimum(s * tps + j, last_tile))

    def t_map(s, i, j):
        return (i, 0, jnp.minimum(s * tps + j, last_tile))

    def o_map(s, i, j):
        return (s * n + i, 0, 0)

    partials = pl.pallas_call(
        kernel,
        out_shape=jax.ShapeDtypeStruct((n_shards * n, 1, 1), jnp.float32),
        grid_spec=pltpu.PrefetchScalarGridSpec(
            num_scalar_prefetch=0,
            grid=(n_shards, n, tps),
            in_specs=[
                pl.BlockSpec((1, c, tl), x_map),   # logits tile (class-major)
                pl.BlockSpec((1, 1, tl), t_map),   # target tile
            ],
            out_specs=pl.BlockSpec((1, 1, 1), o_map),
            scratch_shapes=[pltpu.VMEM((1, tl), jnp.float32)],
        ),
        # shard & batch axes parallel (v7x 2-TC split), position-tile axis is
        # the sequential accumulation axis.
        compiler_params=pltpu.CompilerParams(
            dimension_semantics=("parallel", "parallel", "arbitrary"),
            vmem_limit_bytes=vmem_limit),
        cost_estimate=cost,
    )(x3, t3)

    total = jnp.sum(partials)
    if size_average:
        total = total / r_total
    return total


def _reference(logits, target, gamma, size_average, temperature):
    """Pure-JAX mirror of the PyTorch forward (including the weight term)."""
    if logits.ndim > 2:
        n, c = logits.shape[0], logits.shape[1]
        xr = jnp.transpose(logits.reshape(n, c, -1), (0, 2, 1)).reshape(-1, c)
    else:
        xr = logits
    tr = target.reshape(-1)
    logp = jax.nn.log_softmax(xr, axis=-1)
    probs = jnp.exp(logp)
    logp_k = jnp.take_along_axis(logp, tr[:, None], axis=1)[:, 0]
    p_k = jnp.exp(logp_k)
    p_j = jnp.max(jnp.where(probs < p_k[:, None], probs, 0.0), axis=-1)
    loss = -1.0 * (1.0 - p_k + p_j) ** gamma * logp_k
    weight = jnp.exp(jnp.clip(loss, 0.0, temperature) / (temperature + 1.0)) - 1.0
    loss = loss * weight
    return loss.mean() if size_average else loss.sum()


if __name__ == "__main__":
    key = jax.random.PRNGKey(0)
    k1, k2, k3, k4 = jax.random.split(key, 4)

    N, C, H, W = 2, 4, 16, 16
    x = jax.random.normal(k1, (N, C, H, W), dtype=jnp.float32)
    target = jax.random.randint(k2, (N, H, W), 0, C, dtype=jnp.int32)

    # ragged spatial extent -> exercises the in-kernel tail mask (225 % 128 != 0)
    Hr = Wr = 15
    xr_in = jax.random.normal(k3, (N, C, Hr, Wr), dtype=jnp.float32)
    tr_in = jax.random.randint(k4, (N, Hr, Wr), 0, C, dtype=jnp.int32)

    cases = [
        (x, target, dict(gamma=0, size_average=False, temperature=1.0)),
        (x, target, dict(gamma=2, size_average=True, temperature=1.5)),
        # force multiple position tiles -> exercises the 2-way shard split
        (x, target, dict(gamma=2, size_average=False, temperature=1.0, max_tl=128)),
        # ragged + multi-tile -> exercises tail mask and tile-index clamp
        (xr_in, tr_in, dict(gamma=0, size_average=False, temperature=1.0, max_tl=128)),
        # bf16 logits: DMA stays bf16, cast to f32 happens in-kernel
        (x.astype(jnp.bfloat16), target,
         dict(gamma=2, size_average=False, temperature=1.0)),
    ]
    for xi, ti, cfg in cases:
        out = dual_focal_loss_exp(xi, ti, **cfg)
        out = jax.block_until_ready(out)
        ref = _reference(xi.astype(jnp.float32), ti, cfg["gamma"],
                         cfg["size_average"], cfg["temperature"])
        assert jnp.allclose(out, ref, rtol=1e-5, atol=1e-4), (cfg, out, ref)

    print("KERNEL_OK")
</pallas_src>

<mosaic_0001>
module attributes {stable_mosaic.version = 11 : i64} {
  func.func @_dfl_exp_kernel(%arg0: i32, %arg1: i32, %arg2: i32, %arg3: memref<1x4x256xf32, #tpu.memory_space<vmem>>, %arg4: memref<1x1x256xi32, #tpu.memory_space<vmem>>, %arg5: memref<1x1x1xf32, #tpu.memory_space<vmem>>, %arg6: memref<1x256xf32, #tpu.memory_space<vmem>>) attributes {dimension_semantics = [#tpu.dimension_semantics<parallel>, #tpu.dimension_semantics<parallel>, #tpu.dimension_semantics<arbitrary>], iteration_bounds = array<i64: 1, 2, 1>, scalar_prefetch = 0 : i64, scratch_operands = 1 : i64, tpu.core_type = #tpu.core_type<tc>, window_params = [{transform_indices = @transform_0, window_bounds = array<i64: 1, 4, 256>}, {transform_indices = @transform_1, window_bounds = array<i64: 1, 1, 256>}, {transform_indices = @transform_2, window_bounds = array<i64: 1, 1, 1>}]} {
    %c0_i32 = arith.constant 0 : i32
    %0 = arith.cmpi eq, %arg2, %c0_i32 : i32
    %1 = arith.extui %0 : i1 to i32
    %c0_i32_0 = arith.constant 0 : i32
    %2 = arith.cmpi ne, %1, %c0_i32_0 : i32
    scf.if %2 {
      %cst_20 = arith.constant 0.000000e+00 : f32
      %41 = vector.broadcast %cst_20 : f32 to vector<1x256xf32>
      %c0_21 = arith.constant 0 : index
      %c0_22 = arith.constant 0 : index
      %42 = vector.load %arg6[%c0_21, %c0_22] : memref<1x256xf32, #tpu.memory_space<vmem>>, vector<1x256xf32>
      tpu.vector_store %arg6[%c0_21, %c0_22], %41 {strides = array<i32>} : memref<1x256xf32, #tpu.memory_space<vmem>>, vector<1x256xf32>,
    } else {
    }
    %c0 = arith.constant 0 : index
    %c0_1 = arith.constant 0 : index
    %c0_2 = arith.constant 0 : index
    %3 = vector.load %arg3[%c0, %c0_1, %c0_2] : memref<1x4x256xf32, #tpu.memory_space<vmem>>, vector<1x4x256xf32>
    %4 = vector.shape_cast %3 : vector<1x4x256xf32> to vector<4x256xf32>
    %c0_3 = arith.constant 0 : index
    %c0_4 = arith.constant 0 : index
    %c0_5 = arith.constant 0 : index
    %5 = vector.load %arg4[%c0_3, %c0_4, %c0_5] : memref<1x1x256xi32, #tpu.memory_space<vmem>>, vector<1x1x256xi32>
    %6 = vector.shape_cast %5 : vector<1x1x256xi32> to vector<1x256xi32>
    %cst = arith.constant dense<0xFF800000> : vector<256xf32>
    %7 = vector.multi_reduction <maximumf>, %4, %cst [0] : vector<4x256xf32> to vector<256xf32>
    %8 = vector.shape_cast %7 : vector<256xf32> to vector<1x256xf32>
    %9 = vector.broadcast %8 : vector<1x256xf32> to vector<4x256xf32>
    %10 = arith.subf %4, %9 : vector<4x256xf32>
    %11 = math.exp %10 : vector<4x256xf32>
    %cst_6 = arith.constant dense<0.000000e+00> : vector<256xf32>
    %12 = vector.multi_reduction <add>, %11, %cst_6 [0] : vector<4x256xf32> to vector<256xf32>
    %13 = vector.shape_cast %12 : vector<256xf32> to vector<1x256xf32>
    %14 = math.log %13 : vector<1x256xf32>
    %15 = tpu.iota {dimensions = array<i32: 0>} : vector<4x256xi32>
    %16 = vector.broadcast %6 : vector<1x256xi32> to vector<4x256xi32>
    %17 = arith.cmpi eq, %15, %16 : vector<4x256xi32>
    %cst_7 = arith.constant 0xFF800000 : f32
    %18 = vector.broadcast %cst_7 : f32 to vector<4x256xf32>
    %19 = arith.select %17, %10, %18 : vector<4x256xi1>, vector<4x256xf32>
    %cst_8 = arith.constant dense<0xFF800000> : vector<256xf32>
    %20 = vector.multi_reduction <maximumf>, %19, %cst_8 [0] : vector<4x256xf32> to vector<256xf32>
    %21 = vector.shape_cast %20 : vector<256xf32> to vector<1x256xf32>
    %22 = arith.subf %21, %14 : vector<1x256xf32>
    %cst_9 = arith.constant 0.000000e+00 : f32
    %23 = vector.broadcast %cst_9 : f32 to vector<1x256xf32>
    %24 = arith.subf %23, %22 : vector<1x256xf32>
    %cst_10 = arith.constant 0.000000e+00 : f32
    %cst_11 = arith.constant 1.000000e+00 : f32
    %25 = vector.broadcast %cst_10 : f32 to vector<1x256xf32>
    %26 = arith.maximumf %25, %24 : vector<1x256xf32>
    %27 = vector.broadcast %cst_11 : f32 to vector<1x256xf32>
    %28 = arith.minimumf %27, %26 : vector<1x256xf32>
    %cst_12 = arith.constant 2.000000e+00 : f32
    %29 = vector.broadcast %cst_12 : f32 to vector<1x256xf32>
    %30 = arith.divf %28, %29 : vector<1x256xf32>
    %31 = math.exp %30 : vector<1x256xf32>
    %cst_13 = arith.constant 1.000000e+00 : f32
    %32 = vector.broadcast %cst_13 : f32 to vector<1x256xf32>
    %33 = arith.subf %31, %32 : vector<1x256xf32>
    %34 = arith.mulf %24, %33 : vector<1x256xf32>
    %c0_14 = arith.constant 0 : index
    %c0_15 = arith.constant 0 : index
    %35 = vector.load %arg6[%c0_14, %c0_15] : memref<1x256xf32, #tpu.memory_space<vmem>>, vector<1x256xf32>
    %36 = arith.addf %35, %34 : vector<1x256xf32>
    %c0_16 = arith.constant 0 : index
    %c0_17 = arith.constant 0 : index
    %37 = vector.load %arg6[%c0_16, %c0_17] : memref<1x256xf32, #tpu.memory_space<vmem>>, vector<1x256xf32>
    tpu.vector_store %arg6[%c0_16, %c0_17], %36 {strides = array<i32>} : memref<1x256xf32, #tpu.memory_space<vmem>>, vector<1x256xf32>,
    %c0_i32_18 = arith.constant 0 : i32
    %38 = arith.cmpi eq, %arg2, %c0_i32_18 : i32
    %39 = arith.extui %38 : i1 to i32
    %c0_i32_19 = arith.constant 0 : i32
    %40 = arith.cmpi ne, %39, %c0_i32_19 : i32
    scf.if %40 {
      %c0_20 = arith.constant 0 : index
      %c0_21 = arith.constant 0 : index
      %41 = vector.load %arg6[%c0_20, %c0_21] : memref<1x256xf32, #tpu.memory_space<vmem>>, vector<1x256xf32>
      %42 = vector.shape_cast %41 : vector<1x256xf32> to vector<1x1x256xf32>
      %cst_22 = arith.constant dense<0.000000e+00> : vector<1xf32>
      %43 = vector.multi_reduction <add>, %42, %cst_22 [1, 2] : vector<1x1x256xf32> to vector<1xf32>
      %44 = vector.shape_cast %43 : vector<1xf32> to vector<1x1x1xf32>
      %45 = vector.extract %44[0, 0, 0] : f32 from vector<1x1x1xf32>
      %46 = vector.broadcast %45 : f32 to vector<1x1x1xf32>
      %c0_23 = arith.constant 0 : index
      %c0_24 = arith.constant 0 : index
      %c0_25 = arith.constant 0 : index
      %47 = vector.load %arg5[%c0_23, %c0_24, %c0_25] : memref<1x1x1xf32, #tpu.memory_space<vmem>>, vector<1x1x1xf32>
      tpu.vector_store %arg5[%c0_23, %c0_24, %c0_25], %46 {strides = array<i32>} : memref<1x1x1xf32, #tpu.memory_space<vmem>>, vector<1x1x1xf32>,
    } else {
    }
    return
  }
  func.func @transform_0(%arg0: i32, %arg1: i32, %arg2: i32) -> (i32, i32, i32) {
    %c1_i32 = arith.constant 1 : i32
    %0 = arith.muli %arg0, %c1_i32 : i32
    %1 = arith.addi %0, %arg2 : i32
    %c0_i32 = arith.constant 0 : i32
    %2 = arith.minsi %1, %c0_i32 : i32
    %c0_i32_0 = arith.constant 0 : i32
    %c0_i32_1 = arith.constant 0 : i32
    return %arg1, %c0_i32_0, %2 : i32, i32, i32
  }
  func.func @transform_1(%arg0: i32, %arg1: i32, %arg2: i32) -> (i32, i32, i32) {
    %c1_i32 = arith.constant 1 : i32
    %0 = arith.muli %arg0, %c1_i32 : i32
    %1 = arith.addi %0, %arg2 : i32
    %c0_i32 = arith.constant 0 : i32
    %2 = arith.minsi %1, %c0_i32 : i32
    %c0_i32_0 = arith.constant 0 : i32
    %c0_i32_1 = arith.constant 0 : i32
    return %arg1, %c0_i32_0, %2 : i32, i32, i32
  }
  func.func @transform_2(%arg0: i32, %arg1: i32, %arg2: i32) -> (i32, i32, i32) {
    %c2_i32 = arith.constant 2 : i32
    %0 = arith.muli %arg0, %c2_i32 : i32
    %1 = arith.addi %0, %arg1 : i32
    %c0_i32 = arith.constant 0 : i32
    %c0_i32_0 = arith.constant 0 : i32
    %c0_i32_1 = arith.constant 0 : i32
    return %1, %c0_i32, %c0_i32_0 : i32, i32, i32
  }
}

</mosaic_0001>

<llo_original>
// kernel: tpu_custom_call.1
$region0: #{tpu_custom_call.1}
  #allocation0 [shape = 'u32[]', space=smem, size = 0x4, offset = 0x4, fixed_abs, tag = 'smem constant byte address 0x4 - core index']
  #allocation1 [shape = 'u32[144,128]{1,0:T(1,128)}', space=vmem, size = 0x12000, scoped, tag = 'internal scratch']
  #allocation2 [shape = 'f32[1,256]{1,0:T(1,128)}', space=vmem, size = 0x400, scoped, tag = 'scratch operand']
  %s0 = inlined_call_operand.hbm [shape: f32[2,4,256], index: 0, kind: input, shape index: {}]
  %s1 = inlined_call_operand.hbm [shape: s32[2,1,256], index: 1, kind: input, shape index: {}]
  %s2 = inlined_call_operand.vmem [shape: f32[2,1,1], index: 2, kind: output, shape index: {}]
  %s3 = sld [smem:[#allocation0]]
  $region57: #{tpu_custom_call.1} parent=0
    _
  %s5 = ssub.s32 1, %s3
  %s6 = scalar_select 0, %s5, %s3
  $region1: #{tpu_custom_call.1} parent=0
    #allocation3 [shape = 'u8[8192]{0}', space=vmem, size = 0x2000, scoped, tag = 'input window, operand 0']
    #allocation4 [shape = 's32[2]{0}', space=sflag, size = 0x8, scoped, tag = 'scoped memory for tpu_custom_call.1']
    #allocation5 [shape = 'u8[2048]{0}', space=vmem, size = 0x800, scoped, tag = 'input window, operand 1']
    #allocation6 [shape = 's32[2]{0}', space=sflag, size = 0x8, scoped, tag = 'scoped memory for tpu_custom_call.1']
    %7 = vsyncpa [#allocation4], 0
    %s8 = scalar_lea.sflag [#allocation4], 1
    %9 = vsyncpa %s8, 0
    %10 = vsyncpa [#allocation6], 0
    %s11 = scalar_lea.sflag [#allocation6], 1
    %12 = vsyncpa %s11, 0
    loop: start=0, step=1, limit=4
    $region2: #{tpu_custom_call.1} parent=1 // loop_pre_header
      _
    $region3: #{tpu_custom_call.1} parent=1 // loop_header
      %s14 = sphi 0, %s18
      %p15 = scmp.ge.s32.totalorder %s14, 4
      %s21 = sphi 0, %s40
      %s22 = sphi 0, %s36
      %s23 = sphi 0, %s32
      %s24 = sphi 0, %s21
      %s25 = sphi 0, %s22
      %s26 = sphi 0, %s23
      %s27 = sphi 0, %s24
      %s28 = sphi 0, %s25
      %s29 = sphi 0, %s26
      %s51 = sphi 0, %s53
      %s54 = sphi 0, %s51
      %s55 = sphi 0, %s54
      %s71 = sphi 0, %s55
      %s85 = sphi 0, %s87
      %s88 = sphi 0, %s85
      %s89 = sphi 0, %s88
      %s105 = sphi 0, %s89
      %s115 = sphi 0, %s117
      %s118 = sphi 0, %s115
      %s119 = sphi 0, %s118
      %s135 = sphi 0, %s119
    $region4: #{tpu_custom_call.1} parent=1 // loop_header_branch
      %17 = sbr.rel (%p15) target = $region8
    $region5: #{tpu_custom_call.1} parent=1 // loop_body
      %s19 = ssub.s32 %s14, 1
      %s20 = ssub.s32 %s14, 2
      %s30 = sadd.s32 1, %s23
      %p31 = scmp.ge.s32.totalorder %s30, 1
      %s32 = scalar_select %p31, 0, %s30
      %s33 = sadd.s32 1, %s22
      %s34 = scalar_select %p31, %s33, %s22
      %p35 = scmp.ge.s32.totalorder %s34, 2
      %s36 = scalar_select %p35, 0, %s34
      %s37 = sadd.s32 1, %s21
      %s38 = scalar_select %p35, %s37, %s21
      %p39 = scmp.ge.s32.totalorder %s38, 1
      %s40 = scalar_select %p39, 0, %s38
      %s41 = sadd.s32 %s21, %s23
      %p42 = scmp.lt.s32.totalorder %s41, 0
      %s43 = scalar_select %p42, %s41, 0
      %s44 = sadd.s32 %s40, %s32
      %p45 = scmp.lt.s32.totalorder %s44, 0
      %s46 = scalar_select %p45, %s44, 0
      %s47 = ssub.s32 %s22, %s36
      %s48 = ssub.s32 %s43, %s46
      %s49 = sor.u32 %s47, %s48
      %p50 = scmp.eq.s32.totalorder %s49, 0
      %s52 = sadd.s32 %s51, 1
      %s53 = scalar_select %p50, %s51, %s52
      %p56 = pneg %p50
      %p57 = scmp.eq.s32.totalorder %s14, 1
      %p58 = por %p56, %p57
      %p59 = scmp.ne.s32.totalorder %s51, %s54
      %p60 = scmp.eq.s32.totalorder %s14, 0
      %p61 = por %p59, %p60
      %p62 = scmp.ne.s32.totalorder %s51, %s54
      %p63 = scmp.eq.s32.totalorder %s19, 1
      %p64 = por %p62, %p63
      %p65 = scmp.ne.s32.totalorder %s54, %s55
      %p66 = scmp.eq.s32.totalorder %s19, 0
      %p67 = por %p65, %p66
      %p68 = scmp.ne.s32.totalorder %s54, %s55
      %p69 = scmp.eq.s32.totalorder %s20, 1
      %p70 = por %p68, %p69
      %p72 = scmp.ne.s32.totalorder %s55, %s71
      %p73 = scmp.eq.s32.totalorder %s20, 0
      %p74 = por %p72, %p73
      %s75 = sadd.s32 %s21, %s23
      %p76 = scmp.lt.s32.totalorder %s75, 0
      %s77 = scalar_select %p76, %s75, 0
      %s78 = sadd.s32 %s40, %s32
      %p79 = scmp.lt.s32.totalorder %s78, 0
      %s80 = scalar_select %p79, %s78, 0
      %s81 = ssub.s32 %s22, %s36
      %s82 = ssub.s32 %s77, %s80
      %s83 = sor.u32 %s81, %s82
      %p84 = scmp.eq.s32.totalorder %s83, 0
      %s86 = sadd.s32 %s85, 1
      %s87 = scalar_select %p84, %s85, %s86
      %p90 = pneg %p84
      %p91 = scmp.eq.s32.totalorder %s14, 1
      %p92 = por %p90, %p91
      %p93 = scmp.ne.s32.totalorder %s85, %s88
      %p94 = scmp.eq.s32.totalorder %s14, 0
      %p95 = por %p93, %p94
      %p96 = scmp.ne.s32.totalorder %s85, %s88
      %p97 = scmp.eq.s32.totalorder %s19, 1
      %p98 = por %p96, %p97
      %p99 = scmp.ne.s32.totalorder %s88, %s89
      %p100 = scmp.eq.s32.totalorder %s19, 0
      %p101 = por %p99, %p100
      %p102 = scmp.ne.s32.totalorder %s88, %s89
      %p103 = scmp.eq.s32.totalorder %s20, 1
      %p104 = por %p102, %p103
      %p106 = scmp.ne.s32.totalorder %s89, %s105
      %p107 = scmp.eq.s32.totalorder %s20, 0
      %p108 = por %p106, %p107
      %s109 = smul.u32 %s21, 2
      %s110 = sadd.s32 %s109, %s22
      %s111 = smul.u32 %s40, 2
      %s112 = sadd.s32 %s111, %s36
      %s113 = ssub.s32 %s110, %s112
      %p114 = scmp.eq.s32.totalorder %s113, 0
      %s116 = sadd.s32 %s115, 1
      %s117 = scalar_select %p114, %s115, %s116
      %p120 = pneg %p114
      %p121 = scmp.eq.s32.totalorder %s14, 1
      %p122 = por %p120, %p121
      %p123 = scmp.ne.s32.totalorder %s115, %s118
      %p124 = scmp.eq.s32.totalorder %s14, 0
      %p125 = por %p123, %p124
      %p126 = scmp.ne.s32.totalorder %s115, %s118
      %p127 = scmp.eq.s32.totalorder %s19, 1
      %p128 = por %p126, %p127
      %p129 = scmp.ne.s32.totalorder %s118, %s119
      %p130 = scmp.eq.s32.totalorder %s19, 0
      %p131 = por %p129, %p130
      %p132 = scmp.ne.s32.totalorder %s118, %s119
      %p133 = scmp.eq.s32.totalorder %s20, 1
      %p134 = por %p132, %p133
      %p136 = scmp.ne.s32.totalorder %s119, %s135
      %p137 = scmp.eq.s32.totalorder %s20, 0
      %p138 = por %p136, %p137
      %p139 = scmp.le.s32.totalorder 1, %s14
      %p140 = scmp.lt.s32.totalorder %s14, 3
      %p141 = pnand %p139, %p140
      %p142 = pneg %p141
      // Predicated region
      $region9: #{tpu_custom_call.1} parent=5 // pred_check
        _
      $region10: #{tpu_custom_call.1} parent=5 // pred_check_branch
        %144 = sbr.rel (%p141) target = $region12
      $region11: #{tpu_custom_call.1} parent=5 // pred_region
        %s145 = ssub.s32 %s14, 1
      $region12: #{tpu_custom_call.1} parent=5 // pred_fallthru
        _
      %p146 = scmp.lt.s32.totalorder %s14, 2
      // Predicated region
      $region13: #{tpu_custom_call.1} parent=5 // pred_check
        %p147 = pneg %p146
      $region14: #{tpu_custom_call.1} parent=5 // pred_check_branch
        %149 = sbr.rel (%p147) target = $region16
      $region15: #{tpu_custom_call.1} parent=5 // pred_region
        // Predicated region
        $region17: #{tpu_custom_call.1} parent=15 // pred_check
          %p150 = pneg %p61
        $region18: #{tpu_custom_call.1} parent=15 // pred_check_branch
          %152 = sbr.rel (%p150) target = $region20
        $region19: #{tpu_custom_call.1} parent=15 // pred_region
          %s153 = sand.u32 %s51, 1
          %s154 = scalar_lea.sflag [#allocation4], %s153
          %s155 = sand.u32 %s51, 1
          %s156 = smul.addr %s155, 8
          %s157 = scalar_lea.vmem [#allocation3], %s156
          %s158 = sadd.s32 %s21, %s23
          %p159 = scmp.lt.s32.totalorder %s158, 0
          %s160 = scalar_select %p159, %s158, 0
          %s161 = smul.u32 2, %s160
          %s163 = ssub.s32 128, 128
          %164 = vsyncadd %s154, %s163
          %s165 = smul.addr %s22, 2
          %s166 = sadd.s32 %s161, %s165
          %s167 = smul.addr %s166, 64
          %s168 = scalar_lea.hbm %s0, %s167
          %s170 = sshll.u32 %s157, 4
          %s171 = int_to_ptr.vmem [resolvable:$true] %s170
          %173 = dma.hbm_to_vmem [thread:$0]  %s168, 128, %s171, %s154
        $region20: #{tpu_custom_call.1} parent=15 // pred_fallthru
          _
        // Predicated region
        $region21: #{tpu_custom_call.1} parent=15 // pred_check
          %p174 = pneg %p95
        $region22: #{tpu_custom_call.1} parent=15 // pred_check_branch
          %176 = sbr.rel (%p174) target = $region24
        $region23: #{tpu_custom_call.1} parent=15 // pred_region
          %s177 = sand.u32 %s85, 1
          %s178 = scalar_lea.sflag [#allocation6], %s177
          %s179 = sand.u32 %s85, 1
          %s180 = smul.addr %s179, 2
          %s181 = scalar_lea.vmem [#allocation5], %s180
          %s182 = sadd.s32 %s21, %s23
          %p183 = scmp.lt.s32.totalorder %s182, 0
          %s184 = scalar_select %p183, %s182, 0
          %s185 = smul.u32 2, %s184
          %s187 = ssub.s32 32, 32
          %188 = vsyncadd %s178, %s187
          %s189 = smul.addr %s22, 2
          %s190 = sadd.s32 %s185, %s189
          %s191 = smul.addr %s190, 16
          %s192 = scalar_lea.hbm %s1, %s191
          %s194 = sshll.u32 %s181, 4
          %s195 = int_to_ptr.vmem [resolvable:$true] %s194
          %197 = dma.hbm_to_vmem [thread:$0]  %s192, 32, %s195, %s178
        $region24: #{tpu_custom_call.1} parent=15 // pred_fallthru
          _
      $region16: #{tpu_custom_call.1} parent=5 // pred_fallthru
        _
      %p198 = scmp.le.s32.totalorder 1, %s14
      %p199 = scmp.lt.s32.totalorder %s14, 3
      %p200 = pnand %p198, %p199
      %p201 = pneg %p200
      // Predicated region
      $region25: #{tpu_custom_call.1} parent=5 // pred_check
        _
      $region26: #{tpu_custom_call.1} parent=5 // pred_check_branch
        %203 = sbr.rel (%p200) target = $region28
      $region27: #{tpu_custom_call.1} parent=5 // pred_region
        %s204 = ssub.s32 %s14, 1
        %s205 = sand.u32 %s54, 1
        %s206 = scalar_lea.sflag [#allocation4], %s205
        %s207 = sand.u32 %s54, 1
        %s208 = smul.addr %s207, 8
        %s209 = scalar_lea.vmem [#allocation3], %s208
        // Predicated region
        $region29: #{tpu_custom_call.1} parent=27 // pred_check
          %p210 = pneg %p67
        $region30: #{tpu_custom_call.1} parent=27 // pred_check_branch
          %212 = sbr.rel (%p210) target = $region32
        $region31: #{tpu_custom_call.1} parent=27 // pred_region
          %213 = dma.done %s206, 128
        $region32: #{tpu_custom_call.1} parent=27 // pred_fallthru
          _
        %s214 = sand.u32 %s88, 1
        %s215 = scalar_lea.sflag [#allocation6], %s214
        %s216 = sand.u32 %s88, 1
        %s217 = smul.addr %s216, 2
        %s218 = scalar_lea.vmem [#allocation5], %s217
        // Predicated region
        $region33: #{tpu_custom_call.1} parent=27 // pred_check
          %p219 = pneg %p101
        $region34: #{tpu_custom_call.1} parent=27 // pred_check_branch
          %221 = sbr.rel (%p219) target = $region36
        $region35: #{tpu_custom_call.1} parent=27 // pred_region
          %222 = dma.done %s215, 32
        $region36: #{tpu_custom_call.1} parent=27 // pred_fallthru
          _
        %s223 = sand.u32 %s54, 1
        %s224 = scalar_lea.sflag [#allocation4], %s223
        %s225 = sand.u32 %s54, 1
        %s226 = smul.addr %s225, 8
        %s227 = scalar_lea.vmem [#allocation3], %s226
        %p228 = pneg %p67
        %p229 = pneg %p64
        %s230 = sand.u32 %s88, 1
        %s231 = scalar_lea.sflag [#allocation6], %s230
        %s232 = sand.u32 %s88, 1
        %s233 = smul.addr %s232, 2
        %s234 = scalar_lea.vmem [#allocation5], %s233
        %p235 = pneg %p101
        %p236 = pneg %p98
        %p237 = pneg %p131
        %p238 = pneg %p128
        %s239 = smul.u32 %s24, 2
        %s240 = sadd.s32 %s239, %s25
        %p241 = scmp.lt.s32.totalorder %s240, 1
        %s242 = scalar_select %p241, %s240, 1
        %s243 = scalar_lea.vmem %s2, %s242
        %s244 = sadd.s32 %s24, %s26
        %p245 = scmp.lt.s32.totalorder %s244, 0
        %s246 = scalar_select %p245, %s244, 0
        %s247 = smul.u32 2, %s246
        %s248 = sadd.s32 %s24, %s26
        %p249 = scmp.lt.s32.totalorder %s248, 0
        %s250 = scalar_select %p249, %s248, 0
        %s251 = smul.u32 2, %s250
        %s252 = smul.u32 %s24, 2
        %s253 = sadd.s32 %s252, %s25
        %p254 = scmp.lt.s32.totalorder %s253, 1
        %s255 = scalar_select %p254, %s253, 1
        %s256 = scalar_lea.vmem %s2, %s255
        %s257 = smul.u32 %s24, 2
        %s258 = sadd.s32 %s257, %s25
        %p259 = scmp.eq.s32.totalorder %s26, 0
        // Predicated region
        $region37: #{tpu_custom_call.1} parent=27 // pred_check
          %p260 = pneg %p259
        $region38: #{tpu_custom_call.1} parent=27 // pred_check_branch
          %262 = sbr.rel (%p260) target = $region40
        $region39: #{tpu_custom_call.1} parent=27 // pred_region
          %v263 = vlaneseq
          %vm264 = vcmp.ge.s32.totalorder %v263, 0
          %vm265 = vcmp.lt.s32.totalorder %v263, 256
          %vm266 = vmand %vm264, %vm265
          %267 = vst.msk [vmem:[#allocation2] sm:$0x3] %vm266, 0.0
        $region40: #{tpu_custom_call.1} parent=27 // pred_fallthru
          _
        %v268 = vld [vmem:[%s209] sm:$0xff]
        %v269 = vld [vmem:[%s218] sm:$0x3]
        %v271 = vcombine.high %v268, %v268
        %vm273 = vcmask 1043456
        %v274 = vsel %vm273, %v268, -inf
        %v275 = vrot.slane %v274, 4
        %v276 = vmax.f32 %v274, %v275
        %v277 = vrot.slane %v276, 2
        %v278 = vmax.f32 %v276, %v277
        %v279 = vrot.slane %v278, 1
        %v280 = vmax.f32 %v278, %v279
        %v281 = vsel %vm273, %v271, -inf
        %v282 = vrot.slane %v281, 4
        %v283 = vmax.f32 %v281, %v282
        %v284 = vrot.slane %v283, 2
        %v285 = vmax.f32 %v283, %v284
        %v286 = vrot.slane %v285, 1
        %v287 = vmax.f32 %v285, %v286
        %v290 = vcombine.low %v280, %v287
        %v292 = vsub.f32 %v268, %v290
        %v293 = vmul.f32 %v292, 1.442695
        %v294 = vpow.pop %v293
        %v296 = vcombine.high %v294, %v294
        %v298 = vsel %vm273, %v294, 0.0
        %v299 = vrot.slane %v298, 4
        %v300 = vadd.f32 %v298, %v299
        %v301 = vrot.slane %v300, 2
        %v302 = vadd.f32 %v300, %v301
        %v303 = vrot.slane %v302, 1
        %v304 = vadd.f32 %v302, %v303
        %v305 = vsel %vm273, %v296, 0.0
        %v306 = vrot.slane %v305, 4
        %v307 = vadd.f32 %v305, %v306
        %v308 = vrot.slane %v307, 2
        %v309 = vadd.f32 %v307, %v308
        %v310 = vrot.slane %v309, 1
        %v311 = vadd.f32 %v309, %v310
        %v312 = vlog2.pop %v304
        %v313 = vmul.f32 %v312, 0.6931472
        %v314 = vlog2.pop %v311
        %v315 = vmul.f32 %v314, 0.6931472
        %v316 = vlaneseq
        %v317 = vshrl.u32 %v316, 7
        %v318 = vlaneseq
        %v319 = vshrl.u32 %v318, 7
        %v320 = vsub.s32 0, %v319
        %v321 = vrot.slane %v269, %v320
        %v322 = vlaneseq
        %v323 = vshrl.u32 %v322, 7
        %v324 = vsub.s32 1, %v323
        %v325 = vrot.slane %v269, %v324
        %vm326 = vcmp.eq.s32.totalorder %v317, %v321
        %vm327 = vcmp.eq.s32.totalorder %v317, %v325
        %v329 = vcombine.high %v292, %v292
        %v331 = vsel %vm326, %v292, -inf
        %v332 = vsel %vm327, %v329, -inf
        %v333 = vsel %vm273, %v331, -inf
        %v334 = vrot.slane %v333, 4
        %v335 = vmax.f32 %v333, %v334
        %v336 = vrot.slane %v335, 2
        %v337 = vmax.f32 %v335, %v336
        %v338 = vrot.slane %v337, 1
        %v339 = vmax.f32 %v337, %v338
        %v340 = vsel %vm273, %v332, -inf
        %v341 = vrot.slane %v340, 4
        %v342 = vmax.f32 %v340, %v341
        %v343 = vrot.slane %v342, 2
        %v344 = vmax.f32 %v342, %v343
        %v345 = vrot.slane %v344, 1
        %v346 = vmax.f32 %v344, %v345
        %v347 = vsub.f32 %v339, %v313
        %v348 = vsub.f32 %v346, %v315
        %v349 = vsub.f32 0.0, %v347
        %v350 = vsub.f32 0.0, %v348
        %v351 = vmax.f32 %v349, 0.0
        %v352 = vmax.f32 %v350, 0.0
        %v353 = vmin.f32 %v351, 1.0
        %v354 = vmin.f32 %v352, 1.0
        %v355 = vrcp.pop 2.0
        %v356 = vmul.f32 %v353, %v355
        %v357 = vmul.f32 %v354, %v355
        %v358 = vmul.f32 %v356, 1.442695
        %v359 = vpow.pop %v358
        %v360 = vmul.f32 %v357, 1.442695
        %v361 = vpow.pop %v360
        %v362 = vsub.f32 %v359, 1.0
        %v363 = vsub.f32 %v361, 1.0
        %v364 = vmul.f32 %v349, %v362
        %v365 = vmul.f32 %v350, %v363
        %v366 = vld [vmem:[#allocation2] sm:$0x3]
        %v369 = vcombine.low %v364, %v365
        %v371 = vunpack.c.l.s4 1966171168
        %v372 = vunpack.c.0.s8 %v371
        %v373 = vlaneseq
        %v374 = vshrl.u32 %v373, 7
        %v375 = vsub.s32 %v372, %v374
        %v376 = vrot.slane %v369, %v375
        %v378 = vunpack.c.l.s4 1966171168
        %v379 = vunpack.c.0.s8 %v378
        %v380 = vlaneseq
        %v381 = vshrl.u32 %v380, 7
        %v382 = vsub.s32 %v379, %v381
        %v383 = vrot.slane %v376, %v382
        %v385 = vadd.f32 %v366, %v383
        %v386 = vlaneseq
        %vm387 = vcmp.ge.s32.totalorder %v386, 0
        %vm388 = vcmp.lt.s32.totalorder %v386, 256
        %vm389 = vmand %vm387, %vm388
        %390 = vst.msk [vmem:[#allocation2] sm:$0x3] %vm389, %v385
        // Predicated region
        $region41: #{tpu_custom_call.1} parent=27 // pred_check
          %p391 = pneg %p259
        $region42: #{tpu_custom_call.1} parent=27 // pred_check_branch
          %393 = sbr.rel (%p391) target = $region44
        $region43: #{tpu_custom_call.1} parent=27 // pred_region
          %v394 = vld [vmem:[#allocation2] sm:$0x3]
          %v396 = vlaneseq
          %v397 = vshrl.u32 %v396, 7
          %v398 = vsub.s32 0, %v397
          %v399 = vrot.slane %v394, %v398
          %v400 = vlaneseq
          %v401 = vshrl.u32 %v400, 7
          %v402 = vsub.s32 1, %v401
          %v403 = vrot.slane %v394, %v402
          %vm406 = vcmask 1040384
          %v407 = vsel %vm406, %v399, 0.0
          %v408 = vsel %vm406, %v403, 0.0
          %v409 = vadd.f32 %v407, %v408
          %410 = vadd.xlane.f32.xlu0 %v409
          %v411 = vpop.xlane.xlu0 %410
          %v412 = vrot.slane %v411, 4
          %v413 = vadd.f32 %v411, %v412
          %v414 = vrot.slane %v413, 2
          %v415 = vadd.f32 %v413, %v414
          %v416 = vrot.slane %v415, 1
          %v417 = vadd.f32 %v415, %v416
          %s418 = vtos %v417
          %v419 = vstv %s418
          %vm420 = vcmask 0
          %421 = vst.msk [vmem:[%s256] sm:$0x1] %vm420, %v419
        $region44: #{tpu_custom_call.1} parent=27 // pred_fallthru
          _
        %s422 = smul.u32 %s24, 2
        %s423 = sadd.s32 %s422, %s25
        %p424 = scmp.lt.s32.totalorder %s423, 1
        %s425 = scalar_select %p424, %s423, 1
        %s426 = scalar_lea.vmem %s2, %s425
        // Predicated region
        $region45: #{tpu_custom_call.1} parent=27 // pred_check
          %p427 = pneg %p128
        $region46: #{tpu_custom_call.1} parent=27 // pred_check_branch
          %429 = sbr.rel (%p427) target = $region48
        $region47: #{tpu_custom_call.1} parent=27 // pred_region
          %s430 = smul.u32 %s24, 2
          %s431 = sadd.s32 %s430, %s25
        $region48: #{tpu_custom_call.1} parent=27 // pred_fallthru
          _
      $region28: #{tpu_custom_call.1} parent=5 // pred_fallthru
        _
      %p432 = scmp.le.s32.totalorder 2, %s14
      // Predicated region
      $region49: #{tpu_custom_call.1} parent=5 // pred_check
        %p433 = pneg %p432
      $region50: #{tpu_custom_call.1} parent=5 // pred_check_branch
        %435 = sbr.rel (%p433) target = $region52
      $region51: #{tpu_custom_call.1} parent=5 // pred_region
        %s436 = ssub.s32 %s14, 2
        // Predicated region
        $region53: #{tpu_custom_call.1} parent=51 // pred_check
          %p437 = pneg %p134
        $region54: #{tpu_custom_call.1} parent=51 // pred_check_branch
          %439 = sbr.rel (%p437) target = $region56
        $region55: #{tpu_custom_call.1} parent=51 // pred_region
          %s440 = smul.u32 %s27, 2
          %s441 = sadd.s32 %s440, %s28
          %p442 = scmp.lt.s32.totalorder %s441, 1
          %s443 = scalar_select %p442, %s441, 1
          %s444 = scalar_lea.vmem %s2, %s443
        $region56: #{tpu_custom_call.1} parent=51 // pred_fallthru
          _
      $region52: #{tpu_custom_call.1} parent=5 // pred_fallthru
        _
    $region6: #{tpu_custom_call.1} parent=1 // loop_footer
      %s18 = sadd.s32 1, %s14
    $region7: #{tpu_custom_call.1} parent=1 // loop_footer_branch
      %13 = sbr.rel target = $region3
    $region8: #{tpu_custom_call.1} parent=1 // loop_exit
      _
    %445 = vsyncpa [#allocation4], 1
    %s446 = scalar_lea.sflag [#allocation4], 1
    %447 = vsyncpa %s446, 1
    %448 = vsyncpa [#allocation6], 1
    %s449 = scalar_lea.sflag [#allocation6], 1
    %450 = vsyncpa %s449, 1

</llo_original>
